<compile_context>
chip_gen: v7x
topology: tpu7x:2x2x1
jax: 0.10.0
libtpu: 0.0.40
codegen_flags: <defaults>
</compile_context>

<pallas_src>
import functools

import jax
import jax.numpy as jnp
from jax.experimental import pallas as pl
from jax.experimental.pallas import tpu as pltpu


_C1 = 0.01 ** 2
_C2 = 0.03 ** 2


def _multi_scale_loss_kernel(*refs, meta):
    """refs = (pred_0, true_0, pred_1, true_1, ..., out).

    Grid = (N // Nb,) over batch blocks.  Each step computes a weighted partial sum over
    its Nb batch elements for all scales and writes it to its own lane-dense output tile.
    """
    out_ref = refs[-1]
    step_total = jnp.float32(0.0)

    for i, m in enumerate(meta):
        p = refs[2 * i][...].astype(jnp.float32)        # (Nb, C, h, w)
        t = refs[2 * i + 1][...].astype(jnp.float32)    # (Nb, C, h, w)
        _, _, h, w = p.shape

        # ---- Depth (L1) + gradient terms: share d = p - t, reduce immediately ----
        d = p - t
        depth_sum = jnp.sum(jnp.abs(d))
        gy_sum = jnp.sum(jnp.abs(d[:, :, 1:, :] - d[:, :, :-1, :]))   # (dy_p - dy_t)
        gx_sum = jnp.sum(jnp.abs(d[:, :, :, 1:] - d[:, :, :, :-1]))   # (dx_p - dx_t)

        # ---- SSIM: separable 3x3 box pool, applied per statistic (no 5-way stack,
        #      no stacked pooled_h buffer is ever materialized). ----
        def pool3(x):
            a = x[:, :, 0:h - 2, :] + x[:, :, 1:h - 1, :] + x[:, :, 2:h, :]
            return (a[:, :, :, 0:w - 2]
                    + a[:, :, :, 1:w - 1]
                    + a[:, :, :, 2:w]) * (1.0 / 9.0)

        mu_p = pool3(p)
        mu_t = pool3(t)
        sig_p = pool3(p * p) - mu_p * mu_p
        sig_t = pool3(t * t) - mu_t * mu_t
        sig_pt = pool3(p * t) - mu_p * mu_t

        num = (2.0 * mu_p * mu_t + _C1) * (2.0 * sig_pt + _C2)
        den = (mu_p * mu_p + mu_t * mu_t + _C1) * (sig_p + sig_t + _C2)
        # EUP approximate reciprocal + one Newton-Raphson refinement (no VPU divide).
        r = pl.reciprocal(den, approx=True)
        r = r * (2.0 - den * r)
        ssim = num * r
        ssim_sum = jnp.sum(jnp.clip((1.0 - ssim) * 0.5, 0.0, 1.0))

        # Means folded as compile-time reciprocal counts; extra /2 on SSIM as in Loss.
        step_total = step_total + m["weight"] * (
            depth_sum * m["r_depth"]
            + gy_sum * m["r_gy"]
            + gx_sum * m["r_gx"]
            + 0.5 * ssim_sum * m["r_ssim"]
        )

    # Lane-dense (8, 128) unmasked store of the per-block partial sum.
    out_ref[...] = jnp.broadcast_to(step_total, out_ref.shape).astype(out_ref.dtype)


def _nearest_resize_nchw(x, out_h, out_w):
    """PyTorch F.interpolate(mode='nearest'): src = floor(dst * in / out)."""
    _, _, in_h, in_w = x.shape
    if (out_h, out_w) == (in_h, in_w):
        return x
    if in_h % out_h == 0 and in_w % out_w == 0:
        # Integer factor -> pure strided slice (no gather).
        return x[:, :, :: in_h // out_h, :: in_w // out_w]
    hi = (jnp.arange(out_h) * in_h) // out_h
    wi = (jnp.arange(out_w) * in_w) // out_w
    return x[:, :, hi, :][:, :, :, wi]


def _pick_batch_block(n, per_elem_bytes, budget_bytes):
    """Largest divisor of n whose per-step live-set fits the VMEM budget."""
    best = 1
    for nb in range(1, n + 1):
        if n % nb == 0 and nb * per_elem_bytes <= budget_bytes:
            best = nb
    return best


def multi_scale_loss(y_pred_list, y_true, weights=None):
    num_scale = len(y_pred_list)
    weights = [1.0] * num_scale if weights is None else weights
    N, C, H, W = y_true.shape

    shapes = [(int(p.shape[2]), int(p.shape[3])) for p in y_pred_list]

    # --- batch-block size: bigger contiguous DMAs / fewer per-step overheads, bounded
    #     by a conservative per-step live-set budget (safe on v7x's smaller VMEM). ---
    per_elem_f32 = sum(C * h * w * 4 for (h, w) in shapes)
    per_elem_live = 16 * per_elem_f32          # 2 upcast operands + ~12x f32 temporaries
    nb = _pick_batch_block(N, per_elem_live, budget_bytes=24 << 20)
    num_blocks = N // nb

    operands, in_specs, meta = [], [], []
    dma_bytes = 0
    for i in range(num_scale):
        pred = y_pred_list[i]
        h, w = shapes[i]
        t = _nearest_resize_nchw(y_true, h, w)
        # TODO(synk): fold the nearest-resize into the kernel via a strided-H read once
        # inputs are large enough for it to matter; kept as an XLA strided slice here.

        operands += [pred, t]
        # Block over the batch dim only; (h, w) == full trailing dims of each input.
        in_specs += [
            pl.BlockSpec((nb, C, h, w), lambda n: (n, 0, 0, 0)),
            pl.BlockSpec((nb, C, h, w), lambda n: (n, 0, 0, 0)),
        ]
        dma_bytes += 2 * nb * C * h * w * (jnp.dtype(pred.dtype).itemsize
                                           + jnp.dtype(t.dtype).itemsize)
        cnt = float(N * C)
        meta.append(dict(
            weight=float(weights[i]),
            r_depth=1.0 / (cnt * h * w),
            r_gy=1.0 / (cnt * (h - 1) * w),
            r_gx=1.0 / (cnt * h * (w - 1)),
            r_ssim=1.0 / (cnt * (h - 2) * (w - 2)),
        ))

    kernel = functools.partial(_multi_scale_loss_kernel, meta=meta)

    # Explicit scoped-VMEM limit: double-buffered inputs + f32 intermediates + headroom.
    temp_bytes = 12 * nb * per_elem_f32
    vmem_limit = int(min(100 << 20, max(32 << 20, dma_bytes + temp_bytes + (2 << 20))))

    out = pl.pallas_call(
        kernel,
        out_shape=jax.ShapeDtypeStruct((num_blocks, 8, 128), jnp.float32),
        grid=(num_blocks,),
        in_specs=in_specs,
        # One lane-dense output tile per grid step -> no cross-step dependency.
        out_specs=pl.BlockSpec((1, 8, 128), lambda n: (n, 0, 0)),
        compiler_params=pltpu.CompilerParams(
            dimension_semantics=("parallel",),
            vmem_limit_bytes=vmem_limit,
        ),
    )(*operands)
    # Per-block partial sums -> tiny final reduction in the wrapper.
    return jnp.sum(out[:, 0, 0])


# ------------------------- pure-JAX reference (for validation) -------------------------
def _reference_multi_scale_loss(y_pred_list, y_true, weights=None):
    num_scale = len(y_pred_list)
    weights = [1.0] * num_scale if weights is None else weights
    total = jnp.float32(0.0)
    for i in range(num_scale):
        p = y_pred_list[i].astype(jnp.float32)
        t = _nearest_resize_nchw(y_true, p.shape[2], p.shape[3]).astype(jnp.float32)
        depth = jnp.mean(jnp.abs(p - t))
        dyp = p[:, :, 1:, :] - p[:, :, :-1, :]
        dyt = t[:, :, 1:, :] - t[:, :, :-1, :]
        dxp = p[:, :, :, 1:] - p[:, :, :, :-1]
        dxt = t[:, :, :, 1:] - t[:, :, :, :-1]
        grad = jnp.mean(jnp.abs(dyp - dyt)) + jnp.mean(jnp.abs(dxp - dxt))

        Hh, Ww = p.shape[2], p.shape[3]

        def pool3(x):
            acc = jnp.zeros((x.shape[0], x.shape[1], Hh - 2, Ww - 2), jnp.float32)
            for di in range(3):
                for dj in range(3):
                    acc = acc + x[:, :, di:Hh - 2 + di, dj:Ww - 2 + dj]
            return acc / 9.0

        mu_p, mu_t = pool3(p), pool3(t)
        sig_p = pool3(p * p) - mu_p * mu_p
        sig_t = pool3(t * t) - mu_t * mu_t
        sig_pt = pool3(p * t) - mu_p * mu_t
        ssim = ((2 * mu_p * mu_t + _C1) * (2 * sig_pt + _C2)) / (
            (mu_p * mu_p + mu_t * mu_t + _C1) * (sig_p + sig_t + _C2))
        ssim_loss = jnp.mean(jnp.clip((1.0 - ssim) * 0.5, 0.0, 1.0))
        total = total + (depth + grad + ssim_loss / 2.0) * weights[i]
    return total


if __name__ == "__main__":
    key = jax.random.PRNGKey(0)
    k0, k1, k2 = jax.random.split(key, 3)

    N, C, H, W = 2, 1, 16, 16
    # Multi-scale predictions: full res and half res (num_scale = 2).
    y_pred = [
        jax.random.uniform(k0, (N, C, H, W), jnp.float32, 0.1, 1.0),
        jax.random.uniform(k1, (N, C, H // 2, W // 2), jnp.float32, 0.1, 1.0),
    ]
    y_true = jax.random.uniform(k2, (N, C, H, W), jnp.float32, 0.1, 1.0)

    loss = jax.block_until_ready(multi_scale_loss(y_pred, y_true))
    assert jnp.isfinite(loss)

    ref = jax.block_until_ready(_reference_multi_scale_loss(y_pred, y_true))
    # Tight tolerance: approx reciprocal is refined with one Newton-Raphson step; the only
    # remaining differences are f32 summation-order rounding.
    assert abs(float(loss) - float(ref)) < 1e-3 * max(1.0, abs(float(ref))), (
        float(loss), float(ref))

    print("KERNEL_OK")
</pallas_src>

<mosaic_0001>
module attributes {stable_mosaic.version = 11 : i64} {
  func.func @_multi_scale_loss_kernel(%arg0: i32, %arg1: memref<2x1x16x16xf32, #tpu.memory_space<vmem>>, %arg2: memref<2x1x16x16xf32, #tpu.memory_space<vmem>>, %arg3: memref<2x1x8x8xf32, #tpu.memory_space<vmem>>, %arg4: memref<2x1x8x8xf32, #tpu.memory_space<vmem>>, %arg5: memref<1x8x128xf32, #tpu.memory_space<vmem>>) attributes {dimension_semantics = [#tpu.dimension_semantics<parallel>], iteration_bounds = array<i64: 1>, scalar_prefetch = 0 : i64, scratch_operands = 0 : i64, tpu.core_type = #tpu.core_type<tc>, window_params = [{transform_indices = @transform_0, window_bounds = array<i64: 2, 1, 16, 16>}, {transform_indices = @transform_1, window_bounds = array<i64: 2, 1, 16, 16>}, {transform_indices = @transform_2, window_bounds = array<i64: 2, 1, 8, 8>}, {transform_indices = @transform_3, window_bounds = array<i64: 2, 1, 8, 8>}, {transform_indices = @transform_4, window_bounds = array<i64: 1, 8, 128>}]} {
    %c0 = arith.constant 0 : index
    %c0_0 = arith.constant 0 : index
    %c0_1 = arith.constant 0 : index
    %c0_2 = arith.constant 0 : index
    %0 = vector.load %arg1[%c0, %c0_0, %c0_1, %c0_2] : memref<2x1x16x16xf32, #tpu.memory_space<vmem>>, vector<2x1x16x16xf32>
    %c0_3 = arith.constant 0 : index
    %c0_4 = arith.constant 0 : index
    %c0_5 = arith.constant 0 : index
    %c0_6 = arith.constant 0 : index
    %1 = vector.load %arg2[%c0_3, %c0_4, %c0_5, %c0_6] : memref<2x1x16x16xf32, #tpu.memory_space<vmem>>, vector<2x1x16x16xf32>
    %2 = arith.subf %0, %1 : vector<2x1x16x16xf32>
    %3 = math.absf %2 : vector<2x1x16x16xf32>
    %4 = vector.shape_cast %3 : vector<2x1x16x16xf32> to vector<1x2x1x16x16xf32>
    %cst = arith.constant dense<0.000000e+00> : vector<1xf32>
    %5 = vector.multi_reduction <add>, %4, %cst [1, 2, 3, 4] : vector<1x2x1x16x16xf32> to vector<1xf32>
    %6 = vector.shape_cast %5 : vector<1xf32> to vector<1x1x1x1x1xf32>
    %7 = vector.extract %6[0, 0, 0, 0, 0] : f32 from vector<1x1x1x1x1xf32>
    %8 = vector.extract_strided_slice %2 {offsets = [0, 0, 1, 0], sizes = [2, 1, 15, 16], strides = [1, 1, 1, 1]} : vector<2x1x16x16xf32> to vector<2x1x15x16xf32>
    %9 = vector.extract_strided_slice %2 {offsets = [0, 0, 0, 0], sizes = [2, 1, 15, 16], strides = [1, 1, 1, 1]} : vector<2x1x16x16xf32> to vector<2x1x15x16xf32>
    %10 = arith.subf %8, %9 : vector<2x1x15x16xf32>
    %11 = math.absf %10 : vector<2x1x15x16xf32>
    %12 = vector.shape_cast %11 : vector<2x1x15x16xf32> to vector<1x2x1x15x16xf32>
    %cst_7 = arith.constant dense<0.000000e+00> : vector<1xf32>
    %13 = vector.multi_reduction <add>, %12, %cst_7 [1, 2, 3, 4] : vector<1x2x1x15x16xf32> to vector<1xf32>
    %14 = vector.shape_cast %13 : vector<1xf32> to vector<1x1x1x1x1xf32>
    %15 = vector.extract %14[0, 0, 0, 0, 0] : f32 from vector<1x1x1x1x1xf32>
    %16 = vector.extract_strided_slice %2 {offsets = [0, 0, 0, 1], sizes = [2, 1, 16, 15], strides = [1, 1, 1, 1]} : vector<2x1x16x16xf32> to vector<2x1x16x15xf32>
    %17 = vector.extract_strided_slice %2 {offsets = [0, 0, 0, 0], sizes = [2, 1, 16, 15], strides = [1, 1, 1, 1]} : vector<2x1x16x16xf32> to vector<2x1x16x15xf32>
    %18 = arith.subf %16, %17 : vector<2x1x16x15xf32>
    %19 = math.absf %18 : vector<2x1x16x15xf32>
    %20 = vector.shape_cast %19 : vector<2x1x16x15xf32> to vector<1x2x1x16x15xf32>
    %cst_8 = arith.constant dense<0.000000e+00> : vector<1xf32>
    %21 = vector.multi_reduction <add>, %20, %cst_8 [1, 2, 3, 4] : vector<1x2x1x16x15xf32> to vector<1xf32>
    %22 = vector.shape_cast %21 : vector<1xf32> to vector<1x1x1x1x1xf32>
    %23 = vector.extract %22[0, 0, 0, 0, 0] : f32 from vector<1x1x1x1x1xf32>
    %24 = vector.extract_strided_slice %0 {offsets = [0, 0, 0, 0], sizes = [2, 1, 14, 16], strides = [1, 1, 1, 1]} : vector<2x1x16x16xf32> to vector<2x1x14x16xf32>
    %25 = vector.extract_strided_slice %0 {offsets = [0, 0, 1, 0], sizes = [2, 1, 14, 16], strides = [1, 1, 1, 1]} : vector<2x1x16x16xf32> to vector<2x1x14x16xf32>
    %26 = arith.addf %24, %25 : vector<2x1x14x16xf32>
    %27 = vector.extract_strided_slice %0 {offsets = [0, 0, 2, 0], sizes = [2, 1, 14, 16], strides = [1, 1, 1, 1]} : vector<2x1x16x16xf32> to vector<2x1x14x16xf32>
    %28 = arith.addf %26, %27 : vector<2x1x14x16xf32>
    %29 = vector.extract_strided_slice %28 {offsets = [0, 0, 0, 0], sizes = [2, 1, 14, 14], strides = [1, 1, 1, 1]} : vector<2x1x14x16xf32> to vector<2x1x14x14xf32>
    %30 = vector.extract_strided_slice %28 {offsets = [0, 0, 0, 1], sizes = [2, 1, 14, 14], strides = [1, 1, 1, 1]} : vector<2x1x14x16xf32> to vector<2x1x14x14xf32>
    %31 = arith.addf %29, %30 : vector<2x1x14x14xf32>
    %32 = vector.extract_strided_slice %28 {offsets = [0, 0, 0, 2], sizes = [2, 1, 14, 14], strides = [1, 1, 1, 1]} : vector<2x1x14x16xf32> to vector<2x1x14x14xf32>
    %33 = arith.addf %31, %32 : vector<2x1x14x14xf32>
    %cst_9 = arith.constant 0.111111112 : f32
    %34 = vector.broadcast %cst_9 : f32 to vector<2x1x14x14xf32>
    %35 = arith.mulf %33, %34 : vector<2x1x14x14xf32>
    %36 = vector.extract_strided_slice %1 {offsets = [0, 0, 0, 0], sizes = [2, 1, 14, 16], strides = [1, 1, 1, 1]} : vector<2x1x16x16xf32> to vector<2x1x14x16xf32>
    %37 = vector.extract_strided_slice %1 {offsets = [0, 0, 1, 0], sizes = [2, 1, 14, 16], strides = [1, 1, 1, 1]} : vector<2x1x16x16xf32> to vector<2x1x14x16xf32>
    %38 = arith.addf %36, %37 : vector<2x1x14x16xf32>
    %39 = vector.extract_strided_slice %1 {offsets = [0, 0, 2, 0], sizes = [2, 1, 14, 16], strides = [1, 1, 1, 1]} : vector<2x1x16x16xf32> to vector<2x1x14x16xf32>
    %40 = arith.addf %38, %39 : vector<2x1x14x16xf32>
    %41 = vector.extract_strided_slice %40 {offsets = [0, 0, 0, 0], sizes = [2, 1, 14, 14], strides = [1, 1, 1, 1]} : vector<2x1x14x16xf32> to vector<2x1x14x14xf32>
    %42 = vector.extract_strided_slice %40 {offsets = [0, 0, 0, 1], sizes = [2, 1, 14, 14], strides = [1, 1, 1, 1]} : vector<2x1x14x16xf32> to vector<2x1x14x14xf32>
    %43 = arith.addf %41, %42 : vector<2x1x14x14xf32>
    %44 = vector.extract_strided_slice %40 {offsets = [0, 0, 0, 2], sizes = [2, 1, 14, 14], strides = [1, 1, 1, 1]} : vector<2x1x14x16xf32> to vector<2x1x14x14xf32>
    %45 = arith.addf %43, %44 : vector<2x1x14x14xf32>
    %cst_10 = arith.constant 0.111111112 : f32
    %46 = vector.broadcast %cst_10 : f32 to vector<2x1x14x14xf32>
    %47 = arith.mulf %45, %46 : vector<2x1x14x14xf32>
    %48 = arith.mulf %0, %0 : vector<2x1x16x16xf32>
    %49 = vector.extract_strided_slice %48 {offsets = [0, 0, 0, 0], sizes = [2, 1, 14, 16], strides = [1, 1, 1, 1]} : vector<2x1x16x16xf32> to vector<2x1x14x16xf32>
    %50 = vector.extract_strided_slice %48 {offsets = [0, 0, 1, 0], sizes = [2, 1, 14, 16], strides = [1, 1, 1, 1]} : vector<2x1x16x16xf32> to vector<2x1x14x16xf32>
    %51 = arith.addf %49, %50 : vector<2x1x14x16xf32>
    %52 = vector.extract_strided_slice %48 {offsets = [0, 0, 2, 0], sizes = [2, 1, 14, 16], strides = [1, 1, 1, 1]} : vector<2x1x16x16xf32> to vector<2x1x14x16xf32>
    %53 = arith.addf %51, %52 : vector<2x1x14x16xf32>
    %54 = vector.extract_strided_slice %53 {offsets = [0, 0, 0, 0], sizes = [2, 1, 14, 14], strides = [1, 1, 1, 1]} : vector<2x1x14x16xf32> to vector<2x1x14x14xf32>
    %55 = vector.extract_strided_slice %53 {offsets = [0, 0, 0, 1], sizes = [2, 1, 14, 14], strides = [1, 1, 1, 1]} : vector<2x1x14x16xf32> to vector<2x1x14x14xf32>
    %56 = arith.addf %54, %55 : vector<2x1x14x14xf32>
    %57 = vector.extract_strided_slice %53 {offsets = [0, 0, 0, 2], sizes = [2, 1, 14, 14], strides = [1, 1, 1, 1]} : vector<2x1x14x16xf32> to vector<2x1x14x14xf32>
    %58 = arith.addf %56, %57 : vector<2x1x14x14xf32>
    %cst_11 = arith.constant 0.111111112 : f32
    %59 = vector.broadcast %cst_11 : f32 to vector<2x1x14x14xf32>
    %60 = arith.mulf %58, %59 : vector<2x1x14x14xf32>
    %61 = arith.mulf %35, %35 : vector<2x1x14x14xf32>
    %62 = arith.subf %60, %61 : vector<2x1x14x14xf32>
    %63 = arith.mulf %1, %1 : vector<2x1x16x16xf32>
    %64 = vector.extract_strided_slice %63 {offsets = [0, 0, 0, 0], sizes = [2, 1, 14, 16], strides = [1, 1, 1, 1]} : vector<2x1x16x16xf32> to vector<2x1x14x16xf32>
    %65 = vector.extract_strided_slice %63 {offsets = [0, 0, 1, 0], sizes = [2, 1, 14, 16], strides = [1, 1, 1, 1]} : vector<2x1x16x16xf32> to vector<2x1x14x16xf32>
    %66 = arith.addf %64, %65 : vector<2x1x14x16xf32>
    %67 = vector.extract_strided_slice %63 {offsets = [0, 0, 2, 0], sizes = [2, 1, 14, 16], strides = [1, 1, 1, 1]} : vector<2x1x16x16xf32> to vector<2x1x14x16xf32>
    %68 = arith.addf %66, %67 : vector<2x1x14x16xf32>
    %69 = vector.extract_strided_slice %68 {offsets = [0, 0, 0, 0], sizes = [2, 1, 14, 14], strides = [1, 1, 1, 1]} : vector<2x1x14x16xf32> to vector<2x1x14x14xf32>
    %70 = vector.extract_strided_slice %68 {offsets = [0, 0, 0, 1], sizes = [2, 1, 14, 14], strides = [1, 1, 1, 1]} : vector<2x1x14x16xf32> to vector<2x1x14x14xf32>
    %71 = arith.addf %69, %70 : vector<2x1x14x14xf32>
    %72 = vector.extract_strided_slice %68 {offsets = [0, 0, 0, 2], sizes = [2, 1, 14, 14], strides = [1, 1, 1, 1]} : vector<2x1x14x16xf32> to vector<2x1x14x14xf32>
    %73 = arith.addf %71, %72 : vector<2x1x14x14xf32>
    %cst_12 = arith.constant 0.111111112 : f32
    %74 = vector.broadcast %cst_12 : f32 to vector<2x1x14x14xf32>
    %75 = arith.mulf %73, %74 : vector<2x1x14x14xf32>
    %76 = arith.mulf %47, %47 : vector<2x1x14x14xf32>
    %77 = arith.subf %75, %76 : vector<2x1x14x14xf32>
    %78 = arith.mulf %0, %1 : vector<2x1x16x16xf32>
    %79 = vector.extract_strided_slice %78 {offsets = [0, 0, 0, 0], sizes = [2, 1, 14, 16], strides = [1, 1, 1, 1]} : vector<2x1x16x16xf32> to vector<2x1x14x16xf32>
    %80 = vector.extract_strided_slice %78 {offsets = [0, 0, 1, 0], sizes = [2, 1, 14, 16], strides = [1, 1, 1, 1]} : vector<2x1x16x16xf32> to vector<2x1x14x16xf32>
    %81 = arith.addf %79, %80 : vector<2x1x14x16xf32>
    %82 = vector.extract_strided_slice %78 {offsets = [0, 0, 2, 0], sizes = [2, 1, 14, 16], strides = [1, 1, 1, 1]} : vector<2x1x16x16xf32> to vector<2x1x14x16xf32>
    %83 = arith.addf %81, %82 : vector<2x1x14x16xf32>
    %84 = vector.extract_strided_slice %83 {offsets = [0, 0, 0, 0], sizes = [2, 1, 14, 14], strides = [1, 1, 1, 1]} : vector<2x1x14x16xf32> to vector<2x1x14x14xf32>
    %85 = vector.extract_strided_slice %83 {offsets = [0, 0, 0, 1], sizes = [2, 1, 14, 14], strides = [1, 1, 1, 1]} : vector<2x1x14x16xf32> to vector<2x1x14x14xf32>
    %86 = arith.addf %84, %85 : vector<2x1x14x14xf32>
    %87 = vector.extract_strided_slice %83 {offsets = [0, 0, 0, 2], sizes = [2, 1, 14, 14], strides = [1, 1, 1, 1]} : vector<2x1x14x16xf32> to vector<2x1x14x14xf32>
    %88 = arith.addf %86, %87 : vector<2x1x14x14xf32>
    %cst_13 = arith.constant 0.111111112 : f32
    %89 = vector.broadcast %cst_13 : f32 to vector<2x1x14x14xf32>
    %90 = arith.mulf %88, %89 : vector<2x1x14x14xf32>
    %91 = arith.mulf %35, %47 : vector<2x1x14x14xf32>
    %92 = arith.subf %90, %91 : vector<2x1x14x14xf32>
    %cst_14 = arith.constant 2.000000e+00 : f32
    %93 = vector.broadcast %cst_14 : f32 to vector<2x1x14x14xf32>
    %94 = arith.mulf %93, %35 : vector<2x1x14x14xf32>
    %95 = arith.mulf %94, %47 : vector<2x1x14x14xf32>
    %cst_15 = arith.constant 9.99999974E-5 : f32
    %96 = vector.broadcast %cst_15 : f32 to vector<2x1x14x14xf32>
    %97 = arith.addf %95, %96 : vector<2x1x14x14xf32>
    %cst_16 = arith.constant 2.000000e+00 : f32
    %98 = vector.broadcast %cst_16 : f32 to vector<2x1x14x14xf32>
    %99 = arith.mulf %98, %92 : vector<2x1x14x14xf32>
    %cst_17 = arith.constant 8.99999984E-4 : f32
    %100 = vector.broadcast %cst_17 : f32 to vector<2x1x14x14xf32>
    %101 = arith.addf %99, %100 : vector<2x1x14x14xf32>
    %102 = arith.mulf %97, %101 : vector<2x1x14x14xf32>
    %103 = arith.mulf %35, %35 : vector<2x1x14x14xf32>
    %104 = arith.mulf %47, %47 : vector<2x1x14x14xf32>
    %105 = arith.addf %103, %104 : vector<2x1x14x14xf32>
    %cst_18 = arith.constant 9.99999974E-5 : f32
    %106 = vector.broadcast %cst_18 : f32 to vector<2x1x14x14xf32>
    %107 = arith.addf %105, %106 : vector<2x1x14x14xf32>
    %108 = arith.addf %62, %77 : vector<2x1x14x14xf32>
    %cst_19 = arith.constant 8.99999984E-4 : f32
    %109 = vector.broadcast %cst_19 : f32 to vector<2x1x14x14xf32>
    %110 = arith.addf %108, %109 : vector<2x1x14x14xf32>
    %111 = arith.mulf %107, %110 : vector<2x1x14x14xf32>
    %112 = tpu.reciprocal %111 {approx = true} : vector<2x1x14x14xf32> -> vector<2x1x14x14xf32>
    %113 = arith.mulf %111, %112 : vector<2x1x14x14xf32>
    %cst_20 = arith.constant 2.000000e+00 : f32
    %114 = vector.broadcast %cst_20 : f32 to vector<2x1x14x14xf32>
    %115 = arith.subf %114, %113 : vector<2x1x14x14xf32>
    %116 = arith.mulf %112, %115 : vector<2x1x14x14xf32>
    %117 = arith.mulf %102, %116 : vector<2x1x14x14xf32>
    %cst_21 = arith.constant 1.000000e+00 : f32
    %118 = vector.broadcast %cst_21 : f32 to vector<2x1x14x14xf32>
    %119 = arith.subf %118, %117 : vector<2x1x14x14xf32>
    %cst_22 = arith.constant 5.000000e-01 : f32
    %120 = vector.broadcast %cst_22 : f32 to vector<2x1x14x14xf32>
    %121 = arith.mulf %119, %120 : vector<2x1x14x14xf32>
    %cst_23 = arith.constant 0.000000e+00 : f32
    %cst_24 = arith.constant 1.000000e+00 : f32
    %122 = vector.broadcast %cst_23 : f32 to vector<2x1x14x14xf32>
    %123 = arith.maximumf %122, %121 : vector<2x1x14x14xf32>
    %124 = vector.broadcast %cst_24 : f32 to vector<2x1x14x14xf32>
    %125 = arith.minimumf %124, %123 : vector<2x1x14x14xf32>
    %126 = vector.shape_cast %125 : vector<2x1x14x14xf32> to vector<1x2x1x14x14xf32>
    %cst_25 = arith.constant dense<0.000000e+00> : vector<1xf32>
    %127 = vector.multi_reduction <add>, %126, %cst_25 [1, 2, 3, 4] : vector<1x2x1x14x14xf32> to vector<1xf32>
    %128 = vector.shape_cast %127 : vector<1xf32> to vector<1x1x1x1x1xf32>
    %129 = vector.extract %128[0, 0, 0, 0, 0] : f32 from vector<1x1x1x1x1xf32>
    %cst_26 = arith.constant 0.001953125 : f32
    %130 = arith.mulf %7, %cst_26 : f32
    %cst_27 = arith.constant 0.00208333344 : f32
    %131 = arith.mulf %15, %cst_27 : f32
    %132 = arith.addf %130, %131 : f32
    %cst_28 = arith.constant 0.00208333344 : f32
    %133 = arith.mulf %23, %cst_28 : f32
    %134 = arith.addf %132, %133 : f32
    %cst_29 = arith.constant 5.000000e-01 : f32
    %135 = arith.mulf %cst_29, %129 : f32
    %cst_30 = arith.constant 0.00255102036 : f32
    %136 = arith.mulf %135, %cst_30 : f32
    %137 = arith.addf %134, %136 : f32
    %cst_31 = arith.constant 1.000000e+00 : f32
    %138 = arith.mulf %cst_31, %137 : f32
    %cst_32 = arith.constant 0.000000e+00 : f32
    %139 = arith.addf %cst_32, %138 : f32
    %c0_33 = arith.constant 0 : index
    %c0_34 = arith.constant 0 : index
    %c0_35 = arith.constant 0 : index
    %c0_36 = arith.constant 0 : index
    %140 = vector.load %arg3[%c0_33, %c0_34, %c0_35, %c0_36] : memref<2x1x8x8xf32, #tpu.memory_space<vmem>>, vector<2x1x8x8xf32>
    %c0_37 = arith.constant 0 : index
    %c0_38 = arith.constant 0 : index
    %c0_39 = arith.constant 0 : index
    %c0_40 = arith.constant 0 : index
    %141 = vector.load %arg4[%c0_37, %c0_38, %c0_39, %c0_40] : memref<2x1x8x8xf32, #tpu.memory_space<vmem>>, vector<2x1x8x8xf32>
    %142 = arith.subf %140, %141 : vector<2x1x8x8xf32>
    %143 = math.absf %142 : vector<2x1x8x8xf32>
    %144 = vector.shape_cast %143 : vector<2x1x8x8xf32> to vector<1x2x1x8x8xf32>
    %cst_41 = arith.constant dense<0.000000e+00> : vector<1xf32>
    %145 = vector.multi_reduction <add>, %144, %cst_41 [1, 2, 3, 4] : vector<1x2x1x8x8xf32> to vector<1xf32>
    %146 = vector.shape_cast %145 : vector<1xf32> to vector<1x1x1x1x1xf32>
    %147 = vector.extract %146[0, 0, 0, 0, 0] : f32 from vector<1x1x1x1x1xf32>
    %148 = vector.extract_strided_slice %142 {offsets = [0, 0, 1, 0], sizes = [2, 1, 7, 8], strides = [1, 1, 1, 1]} : vector<2x1x8x8xf32> to vector<2x1x7x8xf32>
    %149 = vector.extract_strided_slice %142 {offsets = [0, 0, 0, 0], sizes = [2, 1, 7, 8], strides = [1, 1, 1, 1]} : vector<2x1x8x8xf32> to vector<2x1x7x8xf32>
    %150 = arith.subf %148, %149 : vector<2x1x7x8xf32>
    %151 = math.absf %150 : vector<2x1x7x8xf32>
    %152 = vector.shape_cast %151 : vector<2x1x7x8xf32> to vector<1x2x1x7x8xf32>
    %cst_42 = arith.constant dense<0.000000e+00> : vector<1xf32>
    %153 = vector.multi_reduction <add>, %152, %cst_42 [1, 2, 3, 4] : vector<1x2x1x7x8xf32> to vector<1xf32>
    %154 = vector.shape_cast %153 : vector<1xf32> to vector<1x1x1x1x1xf32>
    %155 = vector.extract %154[0, 0, 0, 0, 0] : f32 from vector<1x1x1x1x1xf32>
    %156 = vector.extract_strided_slice %142 {offsets = [0, 0, 0, 1], sizes = [2, 1, 8, 7], strides = [1, 1, 1, 1]} : vector<2x1x8x8xf32> to vector<2x1x8x7xf32>
    %157 = vector.extract_strided_slice %142 {offsets = [0, 0, 0, 0], sizes = [2, 1, 8, 7], strides = [1, 1, 1, 1]} : vector<2x1x8x8xf32> to vector<2x1x8x7xf32>
    %158 = arith.subf %156, %157 : vector<2x1x8x7xf32>
    %159 = math.absf %158 : vector<2x1x8x7xf32>
    %160 = vector.shape_cast %159 : vector<2x1x8x7xf32> to vector<1x2x1x8x7xf32>
    %cst_43 = arith.constant dense<0.000000e+00> : vector<1xf32>
    %161 = vector.multi_reduction <add>, %160, %cst_43 [1, 2, 3, 4] : vector<1x2x1x8x7xf32> to vector<1xf32>
    %162 = vector.shape_cast %161 : vector<1xf32> to vector<1x1x1x1x1xf32>
    %163 = vector.extract %162[0, 0, 0, 0, 0] : f32 from vector<1x1x1x1x1xf32>
    %164 = vector.extract_strided_slice %140 {offsets = [0, 0, 0, 0], sizes = [2, 1, 6, 8], strides = [1, 1, 1, 1]} : vector<2x1x8x8xf32> to vector<2x1x6x8xf32>
    %165 = vector.extract_strided_slice %140 {offsets = [0, 0, 1, 0], sizes = [2, 1, 6, 8], strides = [1, 1, 1, 1]} : vector<2x1x8x8xf32> to vector<2x1x6x8xf32>
    %166 = arith.addf %164, %165 : vector<2x1x6x8xf32>
    %167 = vector.extract_strided_slice %140 {offsets = [0, 0, 2, 0], sizes = [2, 1, 6, 8], strides = [1, 1, 1, 1]} : vector<2x1x8x8xf32> to vector<2x1x6x8xf32>
    %168 = arith.addf %166, %167 : vector<2x1x6x8xf32>
    %169 = vector.extract_strided_slice %168 {offsets = [0, 0, 0, 0], sizes = [2, 1, 6, 6], strides = [1, 1, 1, 1]} : vector<2x1x6x8xf32> to vector<2x1x6x6xf32>
    %170 = vector.extract_strided_slice %168 {offsets = [0, 0, 0, 1], sizes = [2, 1, 6, 6], strides = [1, 1, 1, 1]} : vector<2x1x6x8xf32> to vector<2x1x6x6xf32>
    %171 = arith.addf %169, %170 : vector<2x1x6x6xf32>
    %172 = vector.extract_strided_slice %168 {offsets = [0, 0, 0, 2], sizes = [2, 1, 6, 6], strides = [1, 1, 1, 1]} : vector<2x1x6x8xf32> to vector<2x1x6x6xf32>
    %173 = arith.addf %171, %172 : vector<2x1x6x6xf32>
    %cst_44 = arith.constant 0.111111112 : f32
    %174 = vector.broadcast %cst_44 : f32 to vector<2x1x6x6xf32>
    %175 = arith.mulf %173, %174 : vector<2x1x6x6xf32>
    %176 = vector.extract_strided_slice %141 {offsets = [0, 0, 0, 0], sizes = [2, 1, 6, 8], strides = [1, 1, 1, 1]} : vector<2x1x8x8xf32> to vector<2x1x6x8xf32>
    %177 = vector.extract_strided_slice %141 {offsets = [0, 0, 1, 0], sizes = [2, 1, 6, 8], strides = [1, 1, 1, 1]} : vector<2x1x8x8xf32> to vector<2x1x6x8xf32>
    %178 = arith.addf %176, %177 : vector<2x1x6x8xf32>
    %179 = vector.extract_strided_slice %141 {offsets = [0, 0, 2, 0], sizes = [2, 1, 6, 8], strides = [1, 1, 1, 1]} : vector<2x1x8x8xf32> to vector<2x1x6x8xf32>
    %180 = arith.addf %178, %179 : vector<2x1x6x8xf32>
    %181 = vector.extract_strided_slice %180 {offsets = [0, 0, 0, 0], sizes = [2, 1, 6, 6], strides = [1, 1, 1, 1]} : vector<2x1x6x8xf32> to vector<2x1x6x6xf32>
    %182 = vector.extract_strided_slice %180 {offsets = [0, 0, 0, 1], sizes = [2, 1, 6, 6], strides = [1, 1, 1, 1]} : vector<2x1x6x8xf32> to vector<2x1x6x6xf32>
    %183 = arith.addf %181, %182 : vector<2x1x6x6xf32>
    %184 = vector.extract_strided_slice %180 {offsets = [0, 0, 0, 2], sizes = [2, 1, 6, 6], strides = [1, 1, 1, 1]} : vector<2x1x6x8xf32> to vector<2x1x6x6xf32>
    %185 = arith.addf %183, %184 : vector<2x1x6x6xf32>
    %cst_45 = arith.constant 0.111111112 : f32
    %186 = vector.broadcast %cst_45 : f32 to vector<2x1x6x6xf32>
    %187 = arith.mulf %185, %186 : vector<2x1x6x6xf32>
    %188 = arith.mulf %140, %140 : vector<2x1x8x8xf32>
    %189 = vector.extract_strided_slice %188 {offsets = [0, 0, 0, 0], sizes = [2, 1, 6, 8], strides = [1, 1, 1, 1]} : vector<2x1x8x8xf32> to vector<2x1x6x8xf32>
    %190 = vector.extract_strided_slice %188 {offsets = [0, 0, 1, 0], sizes = [2, 1, 6, 8], strides = [1, 1, 1, 1]} : vector<2x1x8x8xf32> to vector<2x1x6x8xf32>
    %191 = arith.addf %189, %190 : vector<2x1x6x8xf32>
    %192 = vector.extract_strided_slice %188 {offsets = [0, 0, 2, 0], sizes = [2, 1, 6, 8], strides = [1, 1, 1, 1]} : vector<2x1x8x8xf32> to vector<2x1x6x8xf32>
    %193 = arith.addf %191, %192 : vector<2x1x6x8xf32>
    %194 = vector.extract_strided_slice %193 {offsets = [0, 0, 0, 0], sizes = [2, 1, 6, 6], strides = [1, 1, 1, 1]} : vector<2x1x6x8xf32> to vector<2x1x6x6xf32>
    %195 = vector.extract_strided_slice %193 {offsets = [0, 0, 0, 1], sizes = [2, 1, 6, 6], strides = [1, 1, 1, 1]} : vector<2x1x6x8xf32> to vector<2x1x6x6xf32>
    %196 = arith.addf %194, %195 : vector<2x1x6x6xf32>
    %197 = vector.extract_strided_slice %193 {offsets = [0, 0, 0, 2], sizes = [2, 1, 6, 6], strides = [1, 1, 1, 1]} : vector<2x1x6x8xf32> to vector<2x1x6x6xf32>
    %198 = arith.addf %196, %197 : vector<2x1x6x6xf32>
    %cst_46 = arith.constant 0.111111112 : f32
    %199 = vector.broadcast %cst_46 : f32 to vector<2x1x6x6xf32>
    %200 = arith.mulf %198, %199 : vector<2x1x6x6xf32>
    %201 = arith.mulf %175, %175 : vector<2x1x6x6xf32>
    %202 = arith.subf %200, %201 : vector<2x1x6x6xf32>
    %203 = arith.mulf %141, %141 : vector<2x1x8x8xf32>
    %204 = vector.extract_strided_slice %203 {offsets = [0, 0, 0, 0], sizes = [2, 1, 6, 8], strides = [1, 1, 1, 1]} : vector<2x1x8x8xf32> to vector<2x1x6x8xf32>
    %205 = vector.extract_strided_slice %203 {offsets = [0, 0, 1, 0], sizes = [2, 1, 6, 8], strides = [1, 1, 1, 1]} : vector<2x1x8x8xf32> to vector<2x1x6x8xf32>
    %206 = arith.addf %204, %205 : vector<2x1x6x8xf32>
    %207 = vector.extract_strided_slice %203 {offsets = [0, 0, 2, 0], sizes = [2, 1, 6, 8], strides = [1, 1, 1, 1]} : vector<2x1x8x8xf32> to vector<2x1x6x8xf32>
    %208 = arith.addf %206, %207 : vector<2x1x6x8xf32>
    %209 = vector.extract_strided_slice %208 {offsets = [0, 0, 0, 0], sizes = [2, 1, 6, 6], strides = [1, 1, 1, 1]} : vector<2x1x6x8xf32> to vector<2x1x6x6xf32>
    %210 = vector.extract_strided_slice %208 {offsets = [0, 0, 0, 1], sizes = [2, 1, 6, 6], strides = [1, 1, 1, 1]} : vector<2x1x6x8xf32> to vector<2x1x6x6xf32>
    %211 = arith.addf %209, %210 : vector<2x1x6x6xf32>
    %212 = vector.extract_strided_slice %208 {offsets = [0, 0, 0, 2], sizes = [2, 1, 6, 6], strides = [1, 1, 1, 1]} : vector<2x1x6x8xf32> to vector<2x1x6x6xf32>
    %213 = arith.addf %211, %212 : vector<2x1x6x6xf32>
    %cst_47 = arith.constant 0.111111112 : f32
    %214 = vector.broadcast %cst_47 : f32 to vector<2x1x6x6xf32>
    %215 = arith.mulf %213, %214 : vector<2x1x6x6xf32>
    %216 = arith.mulf %187, %187 : vector<2x1x6x6xf32>
    %217 = arith.subf %215, %216 : vector<2x1x6x6xf32>
    %218 = arith.mulf %140, %141 : vector<2x1x8x8xf32>
    %219 = vector.extract_strided_slice %218 {offsets = [0, 0, 0, 0], sizes = [2, 1, 6, 8], strides = [1, 1, 1, 1]} : vector<2x1x8x8xf32> to vector<2x1x6x8xf32>
    %220 = vector.extract_strided_slice %218 {offsets = [0, 0, 1, 0], sizes = [2, 1, 6, 8], strides = [1, 1, 1, 1]} : vector<2x1x8x8xf32> to vector<2x1x6x8xf32>
    %221 = arith.addf %219, %220 : vector<2x1x6x8xf32>
    %222 = vector.extract_strided_slice %218 {offsets = [0, 0, 2, 0], sizes = [2, 1, 6, 8], strides = [1, 1, 1, 1]} : vector<2x1x8x8xf32> to vector<2x1x6x8xf32>
    %223 = arith.addf %221, %222 : vector<2x1x6x8xf32>
    %224 = vector.extract_strided_slice %223 {offsets = [0, 0, 0, 0], sizes = [2, 1, 6, 6], strides = [1, 1, 1, 1]} : vector<2x1x6x8xf32> to vector<2x1x6x6xf32>
    %225 = vector.extract_strided_slice %223 {offsets = [0, 0, 0, 1], sizes = [2, 1, 6, 6], strides = [1, 1, 1, 1]} : vector<2x1x6x8xf32> to vector<2x1x6x6xf32>
    %226 = arith.addf %224, %225 : vector<2x1x6x6xf32>
    %227 = vector.extract_strided_slice %223 {offsets = [0, 0, 0, 2], sizes = [2, 1, 6, 6], strides = [1, 1, 1, 1]} : vector<2x1x6x8xf32> to vector<2x1x6x6xf32>
    %228 = arith.addf %226, %227 : vector<2x1x6x6xf32>
    %cst_48 = arith.constant 0.111111112 : f32
    %229 = vector.broadcast %cst_48 : f32 to vector<2x1x6x6xf32>
    %230 = arith.mulf %228, %229 : vector<2x1x6x6xf32>
    %231 = arith.mulf %175, %187 : vector<2x1x6x6xf32>
    %232 = arith.subf %230, %231 : vector<2x1x6x6xf32>
    %cst_49 = arith.constant 2.000000e+00 : f32
    %233 = vector.broadcast %cst_49 : f32 to vector<2x1x6x6xf32>
    %234 = arith.mulf %233, %175 : vector<2x1x6x6xf32>
    %235 = arith.mulf %234, %187 : vector<2x1x6x6xf32>
    %cst_50 = arith.constant 9.99999974E-5 : f32
    %236 = vector.broadcast %cst_50 : f32 to vector<2x1x6x6xf32>
    %237 = arith.addf %235, %236 : vector<2x1x6x6xf32>
    %cst_51 = arith.constant 2.000000e+00 : f32
    %238 = vector.broadcast %cst_51 : f32 to vector<2x1x6x6xf32>
    %239 = arith.mulf %238, %232 : vector<2x1x6x6xf32>
    %cst_52 = arith.constant 8.99999984E-4 : f32
    %240 = vector.broadcast %cst_52 : f32 to vector<2x1x6x6xf32>
    %241 = arith.addf %239, %240 : vector<2x1x6x6xf32>
    %242 = arith.mulf %237, %241 : vector<2x1x6x6xf32>
    %243 = arith.mulf %175, %175 : vector<2x1x6x6xf32>
    %244 = arith.mulf %187, %187 : vector<2x1x6x6xf32>
    %245 = arith.addf %243, %244 : vector<2x1x6x6xf32>
    %cst_53 = arith.constant 9.99999974E-5 : f32
    %246 = vector.broadcast %cst_53 : f32 to vector<2x1x6x6xf32>
    %247 = arith.addf %245, %246 : vector<2x1x6x6xf32>
    %248 = arith.addf %202, %217 : vector<2x1x6x6xf32>
    %cst_54 = arith.constant 8.99999984E-4 : f32
    %249 = vector.broadcast %cst_54 : f32 to vector<2x1x6x6xf32>
    %250 = arith.addf %248, %249 : vector<2x1x6x6xf32>
    %251 = arith.mulf %247, %250 : vector<2x1x6x6xf32>
    %252 = tpu.reciprocal %251 {approx = true} : vector<2x1x6x6xf32> -> vector<2x1x6x6xf32>
    %253 = arith.mulf %251, %252 : vector<2x1x6x6xf32>
    %cst_55 = arith.constant 2.000000e+00 : f32
    %254 = vector.broadcast %cst_55 : f32 to vector<2x1x6x6xf32>
    %255 = arith.subf %254, %253 : vector<2x1x6x6xf32>
    %256 = arith.mulf %252, %255 : vector<2x1x6x6xf32>
    %257 = arith.mulf %242, %256 : vector<2x1x6x6xf32>
    %cst_56 = arith.constant 1.000000e+00 : f32
    %258 = vector.broadcast %cst_56 : f32 to vector<2x1x6x6xf32>
    %259 = arith.subf %258, %257 : vector<2x1x6x6xf32>
    %cst_57 = arith.constant 5.000000e-01 : f32
    %260 = vector.broadcast %cst_57 : f32 to vector<2x1x6x6xf32>
    %261 = arith.mulf %259, %260 : vector<2x1x6x6xf32>
    %cst_58 = arith.constant 0.000000e+00 : f32
    %cst_59 = arith.constant 1.000000e+00 : f32
    %262 = vector.broadcast %cst_58 : f32 to vector<2x1x6x6xf32>
    %263 = arith.maximumf %262, %261 : vector<2x1x6x6xf32>
    %264 = vector.broadcast %cst_59 : f32 to vector<2x1x6x6xf32>
    %265 = arith.minimumf %264, %263 : vector<2x1x6x6xf32>
    %266 = vector.shape_cast %265 : vector<2x1x6x6xf32> to vector<1x2x1x6x6xf32>
    %cst_60 = arith.constant dense<0.000000e+00> : vector<1xf32>
    %267 = vector.multi_reduction <add>, %266, %cst_60 [1, 2, 3, 4] : vector<1x2x1x6x6xf32> to vector<1xf32>
    %268 = vector.shape_cast %267 : vector<1xf32> to vector<1x1x1x1x1xf32>
    %269 = vector.extract %268[0, 0, 0, 0, 0] : f32 from vector<1x1x1x1x1xf32>
    %cst_61 = arith.constant 7.812500e-03 : f32
    %270 = arith.mulf %147, %cst_61 : f32
    %cst_62 = arith.constant 0.00892857183 : f32
    %271 = arith.mulf %155, %cst_62 : f32
    %272 = arith.addf %270, %271 : f32
    %cst_63 = arith.constant 0.00892857183 : f32
    %273 = arith.mulf %163, %cst_63 : f32
    %274 = arith.addf %272, %273 : f32
    %cst_64 = arith.constant 5.000000e-01 : f32
    %275 = arith.mulf %cst_64, %269 : f32
    %cst_65 = arith.constant 0.013888889 : f32
    %276 = arith.mulf %275, %cst_65 : f32
    %277 = arith.addf %274, %276 : f32
    %cst_66 = arith.constant 1.000000e+00 : f32
    %278 = arith.mulf %cst_66, %277 : f32
    %279 = arith.addf %139, %278 : f32
    %280 = vector.broadcast %279 : f32 to vector<1x8x128xf32>
    %c0_67 = arith.constant 0 : index
    %c0_68 = arith.constant 0 : index
    %c0_69 = arith.constant 0 : index
    %281 = vector.load %arg5[%c0_67, %c0_68, %c0_69] : memref<1x8x128xf32, #tpu.memory_space<vmem>>, vector<1x8x128xf32>
    tpu.vector_store %arg5[%c0_67, %c0_68, %c0_69], %280 {strides = array<i32>} : memref<1x8x128xf32, #tpu.memory_space<vmem>>, vector<1x8x128xf32>,
    return
  }
  func.func @transform_0(%arg0: i32) -> (i32, i32, i32, i32) {
    %c0_i32 = arith.constant 0 : i32
    %c0_i32_0 = arith.constant 0 : i32
    %c0_i32_1 = arith.constant 0 : i32
    %c0_i32_2 = arith.constant 0 : i32
    return %arg0, %c0_i32, %c0_i32_0, %c0_i32_1 : i32, i32, i32, i32
  }
  func.func @transform_1(%arg0: i32) -> (i32, i32, i32, i32) {
    %c0_i32 = arith.constant 0 : i32
    %c0_i32_0 = arith.constant 0 : i32
    %c0_i32_1 = arith.constant 0 : i32
    %c0_i32_2 = arith.constant 0 : i32
    return %arg0, %c0_i32, %c0_i32_0, %c0_i32_1 : i32, i32, i32, i32
  }
  func.func @transform_2(%arg0: i32) -> (i32, i32, i32, i32) {
    %c0_i32 = arith.constant 0 : i32
    %c0_i32_0 = arith.constant 0 : i32
    %c0_i32_1 = arith.constant 0 : i32
    %c0_i32_2 = arith.constant 0 : i32
    return %arg0, %c0_i32, %c0_i32_0, %c0_i32_1 : i32, i32, i32, i32
  }
  func.func @transform_3(%arg0: i32) -> (i32, i32, i32, i32) {
    %c0_i32 = arith.constant 0 : i32
    %c0_i32_0 = arith.constant 0 : i32
    %c0_i32_1 = arith.constant 0 : i32
    %c0_i32_2 = arith.constant 0 : i32
    return %arg0, %c0_i32, %c0_i32_0, %c0_i32_1 : i32, i32, i32, i32
  }
  func.func @transform_4(%arg0: i32) -> (i32, i32, i32) {
    %c0_i32 = arith.constant 0 : i32
    %c0_i32_0 = arith.constant 0 : i32
    %c0_i32_1 = arith.constant 0 : i32
    return %arg0, %c0_i32, %c0_i32_0 : i32, i32, i32
  }
}

</mosaic_0001>

<llo_original>
// kernel: tpu_custom_call.1
$region0: #{tpu_custom_call.1}
  #allocation0 [shape = 'u32[]', space=smem, size = 0x4, offset = 0x4, fixed_abs, tag = 'smem constant byte address 0x4 - core index']
  #allocation1 [shape = 'u32[144,128]{1,0:T(1,128)}', space=vmem, size = 0x12000, scoped, tag = 'internal scratch']
  %s0 = inlined_call_operand.hbm [shape: f32[2,1,16,16], index: 0, kind: input, shape index: {}]
  %s1 = inlined_call_operand.hbm [shape: f32[2,1,16,16], index: 1, kind: input, shape index: {}]
  %s2 = inlined_call_operand.hbm [shape: f32[2,1,8,8], index: 2, kind: input, shape index: {}]
  %s3 = inlined_call_operand.hbm [shape: f32[2,1,8,8], index: 3, kind: input, shape index: {}]
  %s4 = inlined_call_operand.hbm [shape: f32[1,8,128], index: 4, kind: output, shape index: {}]
  %s5 = sld [smem:[#allocation0]]
  $region42: #{tpu_custom_call.1} parent=0
    _
  %s7 = ssub.s32 1, %s5
  %s8 = scalar_select 0, %s7, %s5
  $region1: #{tpu_custom_call.1} parent=0
    #allocation2 [shape = 'u8[16384]{0}', space=vmem, size = 0x4000, scoped, tag = 'input window, operand 0, single buffered']
    #allocation3 [shape = 's32[1]{0}', space=sflag, size = 0x4, scoped, tag = 'scoped memory for tpu_custom_call.1']
    #allocation4 [shape = 's32[1]{0}', space=sflag, size = 0x4, scoped, tag = 'scoped memory for tpu_custom_call.1']
    #allocation5 [shape = 'u8[16384]{0}', space=vmem, size = 0x4000, scoped, tag = 'input window, operand 1, single buffered']
    #allocation6 [shape = 's32[1]{0}', space=sflag, size = 0x4, scoped, tag = 'scoped memory for tpu_custom_call.1']
    #allocation7 [shape = 'u8[8192]{0}', space=vmem, size = 0x2000, scoped, tag = 'input window, operand 2, single buffered']
    #allocation8 [shape = 'u8[8192]{0}', space=vmem, size = 0x2000, scoped, tag = 'input window, operand 3, single buffered']
    #allocation9 [shape = 's32[1]{0}', space=sflag, size = 0x4, scoped, tag = 'scoped memory for tpu_custom_call.1']
    #allocation10 [shape = 'u8[4096]{0}', space=vmem, size = 0x1000, scoped, tag = 'output window, operand 0, single buffered']
    %9 = vsyncpa [#allocation3], 0
    %10 = vsyncpa [#allocation6], 0
    %11 = vsyncpa [#allocation9], 0
    %12 = vsyncpa [#allocation4], 0
    // Predicated region
    $region2: #{tpu_custom_call.1} parent=1 // pred_check
      _
    $region3: #{tpu_custom_call.1} parent=1 // pred_check_branch
      %14 = sbr.rel (0) target = $region5
    $region4: #{tpu_custom_call.1} parent=1 // pred_region
      %s16 = ssub.s32 512, 512
      %17 = vsyncadd [#allocation3], %s16
      %s18 = sshll.u32 [#allocation2], 4
      %s19 = int_to_ptr.vmem [resolvable:$true] %s18
      %24 = dma.hbm_to_vmem [thread:$0]  %s0, 512, %s19, [#allocation3], 128, 128, 8
    $region5: #{tpu_custom_call.1} parent=1 // pred_fallthru
      _
    // Predicated region
    $region6: #{tpu_custom_call.1} parent=1 // pred_check
      _
    $region7: #{tpu_custom_call.1} parent=1 // pred_check_branch
      %26 = sbr.rel (0) target = $region9
    $region8: #{tpu_custom_call.1} parent=1 // pred_region
      %s28 = ssub.s32 512, 512
      %29 = vsyncadd [#allocation6], %s28
      %s30 = sshll.u32 [#allocation5], 4
      %s31 = int_to_ptr.vmem [resolvable:$true] %s30
      %36 = dma.hbm_to_vmem [thread:$0]  %s1, 512, %s31, [#allocation6], 128, 128, 8
    $region9: #{tpu_custom_call.1} parent=1 // pred_fallthru
      _
    // Predicated region
    $region10: #{tpu_custom_call.1} parent=1 // pred_check
      _
    $region11: #{tpu_custom_call.1} parent=1 // pred_check_branch
      %38 = sbr.rel (0) target = $region13
    $region12: #{tpu_custom_call.1} parent=1 // pred_region
      %s40 = ssub.s32 256, 256
      %41 = vsyncadd [#allocation6], %s40
      %s42 = sshll.u32 [#allocation7], 4
      %s43 = int_to_ptr.vmem [resolvable:$true] %s42
      %48 = dma.hbm_to_vmem [thread:$0]  %s2, 256, %s43, [#allocation6], 128, 128, 8
    $region13: #{tpu_custom_call.1} parent=1 // pred_fallthru
      _
    // Predicated region
    $region14: #{tpu_custom_call.1} parent=1 // pred_check
      _
    $region15: #{tpu_custom_call.1} parent=1 // pred_check_branch
      %50 = sbr.rel (0) target = $region17
    $region16: #{tpu_custom_call.1} parent=1 // pred_region
      %s52 = ssub.s32 256, 256
      %53 = vsyncadd [#allocation9], %s52
      %s54 = sshll.u32 [#allocation8], 4
      %s55 = int_to_ptr.vmem [resolvable:$true] %s54
      %60 = dma.hbm_to_vmem [thread:$0]  %s3, 256, %s55, [#allocation9], 128, 128, 8
    $region17: #{tpu_custom_call.1} parent=1 // pred_fallthru
      _
    // Predicated region
    $region18: #{tpu_custom_call.1} parent=1 // pred_check
      _
    $region19: #{tpu_custom_call.1} parent=1 // pred_check_branch
      %62 = sbr.rel (0) target = $region21
    $region20: #{tpu_custom_call.1} parent=1 // pred_region
      %63 = dma.done [#allocation3], 512
    $region21: #{tpu_custom_call.1} parent=1 // pred_fallthru
      _
    // Predicated region
    $region22: #{tpu_custom_call.1} parent=1 // pred_check
      _
    $region23: #{tpu_custom_call.1} parent=1 // pred_check_branch
      %65 = sbr.rel (0) target = $region25
    $region24: #{tpu_custom_call.1} parent=1 // pred_region
      %66 = dma.done [#allocation6], 512
    $region25: #{tpu_custom_call.1} parent=1 // pred_fallthru
      _
    // Predicated region
    $region26: #{tpu_custom_call.1} parent=1 // pred_check
      _
    $region27: #{tpu_custom_call.1} parent=1 // pred_check_branch
      %68 = sbr.rel (0) target = $region29
    $region28: #{tpu_custom_call.1} parent=1 // pred_region
      %69 = dma.done [#allocation6], 256
    $region29: #{tpu_custom_call.1} parent=1 // pred_fallthru
      _
    // Predicated region
    $region30: #{tpu_custom_call.1} parent=1 // pred_check
      _
    $region31: #{tpu_custom_call.1} parent=1 // pred_check_branch
      %71 = sbr.rel (0) target = $region33
    $region32: #{tpu_custom_call.1} parent=1 // pred_region
      %72 = dma.done [#allocation9], 256
    $region33: #{tpu_custom_call.1} parent=1 // pred_fallthru
      _
    %v73 = vld [vmem:[#allocation2] sm:$0xff]
    %v74 = vld [vmem:[#allocation2 + $0x8] sm:$0xff]
    %v75 = vld [vmem:[#allocation2 + $0x10] sm:$0xff]
    %v76 = vld [vmem:[#allocation2 + $0x18] sm:$0xff]
    %v77 = vld [vmem:[#allocation5] sm:$0xff]
    %v78 = vld [vmem:[#allocation5 + $0x8] sm:$0xff]
    %v79 = vld [vmem:[#allocation5 + $0x10] sm:$0xff]
    %v80 = vld [vmem:[#allocation5 + $0x18] sm:$0xff]
    %v81 = vsub.f32 %v73, %v77
    %v82 = vsub.f32 %v74, %v78
    %v83 = vsub.f32 %v75, %v79
    %v84 = vsub.f32 %v76, %v80
    %v85 = vand.u32 2147483647, %v81
    %v86 = vand.u32 2147483647, %v82
    %v87 = vand.u32 2147483647, %v83
    %v88 = vand.u32 2147483647, %v84
    %vm89 = vcmask 130048
    %v90 = vsel %vm89, %v85, 0.0
    %v91 = vsel %vm89, %v86, 0.0
    %v92 = vadd.f32 %v90, %v91
    %v93 = vsel %vm89, %v87, 0.0
    %v94 = vadd.f32 %v92, %v93
    %v95 = vsel %vm89, %v88, 0.0
    %v96 = vadd.f32 %v94, %v95
    %97 = vadd.xlane.f32.xlu0 %v96
    %v98 = vpop.xlane.xlu0 %97
    %v99 = vrot.slane %v98, 4
    %v100 = vadd.f32 %v98, %v99
    %v101 = vrot.slane %v100, 2
    %v102 = vadd.f32 %v100, %v101
    %v103 = vrot.slane %v102, 1
    %v104 = vadd.f32 %v102, %v103
    %s105 = vtos %v104
    %vm110 = vcmask 1040384
    %v111 = vrot.slane %v81, 7
    %v112 = vrot.slane %v82, 7
    %v113 = vsel %vm110, %v111, %v112
    %v114 = vrot.slane %v83, 7
    %v115 = vrot.slane %v84, 7
    %v116 = vsel %vm110, %v114, %v115
    %v121 = vsub.f32 %v81, %v111
    %v122 = vsub.f32 %v82, %v113
    %v123 = vsub.f32 %v83, %v114
    %v124 = vsub.f32 %v84, %v116
    %v125 = vand.u32 2147483647, %v121
    %v126 = vand.u32 2147483647, %v122
    %v127 = vand.u32 2147483647, %v123
    %v128 = vand.u32 2147483647, %v124
    %vm133 = vcmask 1046528
    %v134 = vrot.slane %v125, 1
    %v135 = vrot.slane %v126, 1
    %v136 = vsel %vm133, %v134, %v135
    %v137 = vrot.slane %v127, 1
    %v138 = vrot.slane %v128, 1
    %v139 = vsel %vm133, %v137, %v138
    %v144 = vsel %vm89, %v136, 0.0
    %vm145 = vcmask 129024
    %v146 = vsel %vm145, %v135, 0.0
    %v147 = vadd.f32 %v144, %v146
    %v148 = vsel %vm89, %v139, 0.0
    %v149 = vadd.f32 %v147, %v148
    %v150 = vsel %vm145, %v138, 0.0
    %v151 = vadd.f32 %v149, %v150
    %152 = vadd.xlane.f32.xlu0 %v151
    %v153 = vpop.xlane.xlu0 %152
    %v154 = vrot.slane %v153, 4
    %v155 = vadd.f32 %v153, %v154
    %v156 = vrot.slane %v155, 2
    %v157 = vadd.f32 %v155, %v156
    %v158 = vrot.slane %v157, 1
    %v159 = vadd.f32 %v157, %v158
    %s160 = vtos %v159
    %161 = vrot.lane.b32.xlu0 %v81, 1
    %v162 = vpop.permute.xlu0 %161
    %163 = vrot.lane.b32.xlu0 %v82, 1
    %v164 = vpop.permute.xlu0 %163
    %165 = vrot.lane.b32.xlu0 %v83, 1
    %v166 = vpop.permute.xlu0 %165
    %167 = vrot.lane.b32.xlu0 %v84, 1
    %v168 = vpop.permute.xlu0 %167
    %v173 = vsub.f32 %v81, %v162
    %v174 = vsub.f32 %v82, %v164
    %v175 = vsub.f32 %v83, %v166
    %v176 = vsub.f32 %v84, %v168
    %v177 = vand.u32 2147483647, %v173
    %v178 = vand.u32 2147483647, %v174
    %v179 = vand.u32 2147483647, %v175
    %v180 = vand.u32 2147483647, %v176
    %185 = vrot.lane.b32.xlu0 %v177, 127
    %v186 = vpop.permute.xlu0 %185
    %187 = vrot.lane.b32.xlu0 %v178, 127
    %v188 = vpop.permute.xlu0 %187
    %189 = vrot.lane.b32.xlu0 %v179, 127
    %v190 = vpop.permute.xlu0 %189
    %191 = vrot.lane.b32.xlu0 %v180, 127
    %v192 = vpop.permute.xlu0 %191
    %vm197 = vcmask 121856
    %v198 = vsel %vm197, %v186, 0.0
    %v199 = vsel %vm197, %v188, 0.0
    %v200 = vadd.f32 %v198, %v199
    %v201 = vsel %vm197, %v190, 0.0
    %v202 = vadd.f32 %v200, %v201
    %v203 = vsel %vm197, %v192, 0.0
    %v204 = vadd.f32 %v202, %v203
    %205 = vadd.xlane.f32.xlu0 %v204
    %v206 = vpop.xlane.xlu0 %205
    %v207 = vrot.slane %v206, 4
    %v208 = vadd.f32 %v206, %v207
    %v209 = vrot.slane %v208, 2
    %v210 = vadd.f32 %v208, %v209
    %v211 = vrot.slane %v210, 1
    %v212 = vadd.f32 %v210, %v211
    %s213 = vtos %v212
    %v218 = vrot.slane %v73, 1
    %v219 = vrot.slane %v74, 1
    %v220 = vsel %vm133, %v218, %v219
    %v221 = vrot.slane %v75, 1
    %v222 = vrot.slane %v76, 1
    %v223 = vsel %vm133, %v221, %v222
    %v228 = vadd.f32 %v73, %v220
    %v229 = vadd.f32 %v74, %v219
    %v230 = vadd.f32 %v75, %v223
    %v231 = vadd.f32 %v76, %v222
    %vm232 = vcmask 1045504
    %v233 = vrot.slane %v73, 2
    %v234 = vrot.slane %v74, 2
    %v235 = vsel %vm232, %v233, %v234
    %v236 = vrot.slane %v75, 2
    %v237 = vrot.slane %v76, 2
    %v238 = vsel %vm232, %v236, %v237
    %v243 = vadd.f32 %v228, %v235
    %v244 = vadd.f32 %v229, %v234
    %v245 = vadd.f32 %v230, %v238
    %v246 = vadd.f32 %v231, %v237
    %251 = vrot.lane.b32.xlu0 %v243, 127
    %v252 = vpop.permute.xlu0 %251
    %253 = vrot.lane.b32.xlu0 %v244, 127
    %v254 = vpop.permute.xlu0 %253
    %255 = vrot.lane.b32.xlu0 %v245, 127
    %v256 = vpop.permute.xlu0 %255
    %257 = vrot.lane.b32.xlu0 %v246, 127
    %v258 = vpop.permute.xlu0 %257
    %v263 = vadd.f32 %v243, %v252
    %v264 = vadd.f32 %v244, %v254
    %v265 = vadd.f32 %v245, %v256
    %v266 = vadd.f32 %v246, %v258
    %267 = vrot.lane.b32.xlu0 %v243, 126
    %v268 = vpop.permute.xlu0 %267
    %269 = vrot.lane.b32.xlu0 %v244, 126
    %v270 = vpop.permute.xlu0 %269
    %271 = vrot.lane.b32.xlu0 %v245, 126
    %v272 = vpop.permute.xlu0 %271
    %273 = vrot.lane.b32.xlu0 %v246, 126
    %v274 = vpop.permute.xlu0 %273
    %v279 = vadd.f32 %v263, %v268
    %v280 = vadd.f32 %v264, %v270
    %v281 = vadd.f32 %v265, %v272
    %v282 = vadd.f32 %v266, %v274
    %v283 = vmul.f32 %v279, 0.11111111
    %v284 = vmul.f32 %v280, 0.11111111
    %v285 = vmul.f32 %v281, 0.11111111
    %v286 = vmul.f32 %v282, 0.11111111
    %v291 = vrot.slane %v77, 1
    %v292 = vrot.slane %v78, 1
    %v293 = vsel %vm133, %v291, %v292
    %v294 = vrot.slane %v79, 1
    %v295 = vrot.slane %v80, 1
    %v296 = vsel %vm133, %v294, %v295
    %v301 = vadd.f32 %v77, %v293
    %v302 = vadd.f32 %v78, %v292
    %v303 = vadd.f32 %v79, %v296
    %v304 = vadd.f32 %v80, %v295
    %v305 = vrot.slane %v77, 2
    %v306 = vrot.slane %v78, 2
    %v307 = vsel %vm232, %v305, %v306
    %v308 = vrot.slane %v79, 2
    %v309 = vrot.slane %v80, 2
    %v310 = vsel %vm232, %v308, %v309
    %v315 = vadd.f32 %v301, %v307
    %v316 = vadd.f32 %v302, %v306
    %v317 = vadd.f32 %v303, %v310
    %v318 = vadd.f32 %v304, %v309
    %323 = vrot.lane.b32.xlu0 %v315, 127
    %v324 = vpop.permute.xlu0 %323
    %325 = vrot.lane.b32.xlu0 %v316, 127
    %v326 = vpop.permute.xlu0 %325
    %327 = vrot.lane.b32.xlu0 %v317, 127
    %v328 = vpop.permute.xlu0 %327
    %329 = vrot.lane.b32.xlu0 %v318, 127
    %v330 = vpop.permute.xlu0 %329
    %v335 = vadd.f32 %v315, %v324
    %v336 = vadd.f32 %v316, %v326
    %v337 = vadd.f32 %v317, %v328
    %v338 = vadd.f32 %v318, %v330
    %339 = vrot.lane.b32.xlu0 %v315, 126
    %v340 = vpop.permute.xlu0 %339
    %341 = vrot.lane.b32.xlu0 %v316, 126
    %v342 = vpop.permute.xlu0 %341
    %343 = vrot.lane.b32.xlu0 %v317, 126
    %v344 = vpop.permute.xlu0 %343
    %345 = vrot.lane.b32.xlu0 %v318, 126
    %v346 = vpop.permute.xlu0 %345
    %v351 = vadd.f32 %v335, %v340
    %v352 = vadd.f32 %v336, %v342
    %v353 = vadd.f32 %v337, %v344
    %v354 = vadd.f32 %v338, %v346
    %v355 = vmul.f32 %v351, 0.11111111
    %v356 = vmul.f32 %v352, 0.11111111
    %v357 = vmul.f32 %v353, 0.11111111
    %v358 = vmul.f32 %v354, 0.11111111
    %v359 = vmul.f32 %v73, %v73
    %v360 = vmul.f32 %v74, %v74
    %v361 = vmul.f32 %v75, %v75
    %v362 = vmul.f32 %v76, %v76
    %v367 = vrot.slane %v359, 1
    %v368 = vrot.slane %v360, 1
    %v369 = vsel %vm133, %v367, %v368
    %v370 = vrot.slane %v361, 1
    %v371 = vrot.slane %v362, 1
    %v372 = vsel %vm133, %v370, %v371
    %v377 = vadd.f32 %v359, %v369
    %v378 = vadd.f32 %v360, %v368
    %v379 = vadd.f32 %v361, %v372
    %v380 = vadd.f32 %v362, %v371
    %v381 = vrot.slane %v359, 2
    %v382 = vrot.slane %v360, 2
    %v383 = vsel %vm232, %v381, %v382
    %v384 = vrot.slane %v361, 2
    %v385 = vrot.slane %v362, 2
    %v386 = vsel %vm232, %v384, %v385
    %v391 = vadd.f32 %v377, %v383
    %v392 = vadd.f32 %v378, %v382
    %v393 = vadd.f32 %v379, %v386
    %v394 = vadd.f32 %v380, %v385
    %399 = vrot.lane.b32.xlu0 %v391, 127
    %v400 = vpop.permute.xlu0 %399
    %401 = vrot.lane.b32.xlu0 %v392, 127
    %v402 = vpop.permute.xlu0 %401
    %403 = vrot.lane.b32.xlu0 %v393, 127
    %v404 = vpop.permute.xlu0 %403
    %405 = vrot.lane.b32.xlu0 %v394, 127
    %v406 = vpop.permute.xlu0 %405
    %v411 = vadd.f32 %v391, %v400
    %v412 = vadd.f32 %v392, %v402
    %v413 = vadd.f32 %v393, %v404
    %v414 = vadd.f32 %v394, %v406
    %415 = vrot.lane.b32.xlu0 %v391, 126
    %v416 = vpop.permute.xlu0 %415
    %417 = vrot.lane.b32.xlu0 %v392, 126
    %v418 = vpop.permute.xlu0 %417
    %419 = vrot.lane.b32.xlu0 %v393, 126
    %v420 = vpop.permute.xlu0 %419
    %421 = vrot.lane.b32.xlu0 %v394, 126
    %v422 = vpop.permute.xlu0 %421
    %v427 = vadd.f32 %v411, %v416
    %v428 = vadd.f32 %v412, %v418
    %v429 = vadd.f32 %v413, %v420
    %v430 = vadd.f32 %v414, %v422
    %v431 = vmul.f32 %v427, 0.11111111
    %v432 = vmul.f32 %v428, 0.11111111
    %v433 = vmul.f32 %v429, 0.11111111
    %v434 = vmul.f32 %v430, 0.11111111
    %v435 = vmul.f32 %v283, %v283
    %v436 = vmul.f32 %v284, %v284
    %v437 = vmul.f32 %v285, %v285
    %v438 = vmul.f32 %v286, %v286
    %v439 = vsub.f32 %v431, %v435
    %v440 = vsub.f32 %v432, %v436
    %v441 = vsub.f32 %v433, %v437
    %v442 = vsub.f32 %v434, %v438
    %v443 = vmul.f32 %v77, %v77
    %v444 = vmul.f32 %v78, %v78
    %v445 = vmul.f32 %v79, %v79
    %v446 = vmul.f32 %v80, %v80
    %v451 = vrot.slane %v443, 1
    %v452 = vrot.slane %v444, 1
    %v453 = vsel %vm133, %v451, %v452
    %v454 = vrot.slane %v445, 1
    %v455 = vrot.slane %v446, 1
    %v456 = vsel %vm133, %v454, %v455
    %v461 = vadd.f32 %v443, %v453
    %v462 = vadd.f32 %v444, %v452
    %v463 = vadd.f32 %v445, %v456
    %v464 = vadd.f32 %v446, %v455
    %v465 = vrot.slane %v443, 2
    %v466 = vrot.slane %v444, 2
    %v467 = vsel %vm232, %v465, %v466
    %v468 = vrot.slane %v445, 2
    %v469 = vrot.slane %v446, 2
    %v470 = vsel %vm232, %v468, %v469
    %v475 = vadd.f32 %v461, %v467
    %v476 = vadd.f32 %v462, %v466
    %v477 = vadd.f32 %v463, %v470
    %v478 = vadd.f32 %v464, %v469
    %483 = vrot.lane.b32.xlu0 %v475, 127
    %v484 = vpop.permute.xlu0 %483
    %485 = vrot.lane.b32.xlu0 %v476, 127
    %v486 = vpop.permute.xlu0 %485
    %487 = vrot.lane.b32.xlu0 %v477, 127
    %v488 = vpop.permute.xlu0 %487
    %489 = vrot.lane.b32.xlu0 %v478, 127
    %v490 = vpop.permute.xlu0 %489
    %v495 = vadd.f32 %v475, %v484
    %v496 = vadd.f32 %v476, %v486
    %v497 = vadd.f32 %v477, %v488
    %v498 = vadd.f32 %v478, %v490
    %499 = vrot.lane.b32.xlu0 %v475, 126
    %v500 = vpop.permute.xlu0 %499
    %501 = vrot.lane.b32.xlu0 %v476, 126
    %v502 = vpop.permute.xlu0 %501
    %503 = vrot.lane.b32.xlu0 %v477, 126
    %v504 = vpop.permute.xlu0 %503
    %505 = vrot.lane.b32.xlu0 %v478, 126
    %v506 = vpop.permute.xlu0 %505
    %v511 = vadd.f32 %v495, %v500
    %v512 = vadd.f32 %v496, %v502
    %v513 = vadd.f32 %v497, %v504
    %v514 = vadd.f32 %v498, %v506
    %v515 = vmul.f32 %v511, 0.11111111
    %v516 = vmul.f32 %v512, 0.11111111
    %v517 = vmul.f32 %v513, 0.11111111
    %v518 = vmul.f32 %v514, 0.11111111
    %v519 = vmul.f32 %v355, %v355
    %v520 = vmul.f32 %v356, %v356
    %v521 = vmul.f32 %v357, %v357
    %v522 = vmul.f32 %v358, %v358
    %v523 = vsub.f32 %v515, %v519
    %v524 = vsub.f32 %v516, %v520
    %v525 = vsub.f32 %v517, %v521
    %v526 = vsub.f32 %v518, %v522
    %v527 = vmul.f32 %v73, %v77
    %v528 = vmul.f32 %v74, %v78
    %v529 = vmul.f32 %v75, %v79
    %v530 = vmul.f32 %v76, %v80
    %v535 = vrot.slane %v527, 1
    %v536 = vrot.slane %v528, 1
    %v537 = vsel %vm133, %v535, %v536
    %v538 = vrot.slane %v529, 1
    %v539 = vrot.slane %v530, 1
    %v540 = vsel %vm133, %v538, %v539
    %v545 = vadd.f32 %v527, %v537
    %v546 = vadd.f32 %v528, %v536
    %v547 = vadd.f32 %v529, %v540
    %v548 = vadd.f32 %v530, %v539
    %v549 = vrot.slane %v527, 2
    %v550 = vrot.slane %v528, 2
    %v551 = vsel %vm232, %v549, %v550
    %v552 = vrot.slane %v529, 2
    %v553 = vrot.slane %v530, 2
    %v554 = vsel %vm232, %v552, %v553
    %v559 = vadd.f32 %v545, %v551
    %v560 = vadd.f32 %v546, %v550
    %v561 = vadd.f32 %v547, %v554
    %v562 = vadd.f32 %v548, %v553
    %567 = vrot.lane.b32.xlu0 %v559, 127
    %v568 = vpop.permute.xlu0 %567
    %569 = vrot.lane.b32.xlu0 %v560, 127
    %v570 = vpop.permute.xlu0 %569
    %571 = vrot.lane.b32.xlu0 %v561, 127
    %v572 = vpop.permute.xlu0 %571
    %573 = vrot.lane.b32.xlu0 %v562, 127
    %v574 = vpop.permute.xlu0 %573
    %v579 = vadd.f32 %v559, %v568
    %v580 = vadd.f32 %v560, %v570
    %v581 = vadd.f32 %v561, %v572
    %v582 = vadd.f32 %v562, %v574
    %583 = vrot.lane.b32.xlu0 %v559, 126
    %v584 = vpop.permute.xlu0 %583
    %585 = vrot.lane.b32.xlu0 %v560, 126
    %v586 = vpop.permute.xlu0 %585
    %587 = vrot.lane.b32.xlu0 %v561, 126
    %v588 = vpop.permute.xlu0 %587
    %589 = vrot.lane.b32.xlu0 %v562, 126
    %v590 = vpop.permute.xlu0 %589
    %v595 = vadd.f32 %v579, %v584
    %v596 = vadd.f32 %v580, %v586
    %v597 = vadd.f32 %v581, %v588
    %v598 = vadd.f32 %v582, %v590
    %v599 = vmul.f32 %v595, 0.11111111
    %v600 = vmul.f32 %v596, 0.11111111
    %v601 = vmul.f32 %v597, 0.11111111
    %v602 = vmul.f32 %v598, 0.11111111
    %v603 = vmul.f32 %v283, %v355
    %v604 = vmul.f32 %v284, %v356
    %v605 = vmul.f32 %v285, %v357
    %v606 = vmul.f32 %v286, %v358
    %v607 = vsub.f32 %v599, %v603
    %v608 = vsub.f32 %v600, %v604
    %v609 = vsub.f32 %v601, %v605
    %v610 = vsub.f32 %v602, %v606
    %v611 = vmul.f32 %v283, 2.0
    %v612 = vmul.f32 %v284, 2.0
    %v613 = vmul.f32 %v285, 2.0
    %v614 = vmul.f32 %v286, 2.0
    %v615 = vmul.f32 %v611, %v355
    %v616 = vmul.f32 %v612, %v356
    %v617 = vmul.f32 %v613, %v357
    %v618 = vmul.f32 %v614, %v358
    %v619 = vadd.f32 %v615, 0.0001
    %v620 = vadd.f32 %v616, 0.0001
    %v621 = vadd.f32 %v617, 0.0001
    %v622 = vadd.f32 %v618, 0.0001
    %v623 = vmul.f32 %v607, 2.0
    %v624 = vmul.f32 %v608, 2.0
    %v625 = vmul.f32 %v609, 2.0
    %v626 = vmul.f32 %v610, 2.0
    %v627 = vadd.f32 %v623, 0.0009
    %v628 = vadd.f32 %v624, 0.0009
    %v629 = vadd.f32 %v625, 0.0009
    %v630 = vadd.f32 %v626, 0.0009
    %v631 = vmul.f32 %v619, %v627
    %v632 = vmul.f32 %v620, %v628
    %v633 = vmul.f32 %v621, %v629
    %v634 = vmul.f32 %v622, %v630
    %v635 = vadd.f32 %v435, %v519
    %v636 = vadd.f32 %v436, %v520
    %v637 = vadd.f32 %v437, %v521
    %v638 = vadd.f32 %v438, %v522
    %v639 = vadd.f32 %v635, 0.0001
    %v640 = vadd.f32 %v636, 0.0001
    %v641 = vadd.f32 %v637, 0.0001
    %v642 = vadd.f32 %v638, 0.0001
    %v643 = vadd.f32 %v439, %v523
    %v644 = vadd.f32 %v440, %v524
    %v645 = vadd.f32 %v441, %v525
    %v646 = vadd.f32 %v442, %v526
    %v647 = vadd.f32 %v643, 0.0009
    %v648 = vadd.f32 %v644, 0.0009
    %v649 = vadd.f32 %v645, 0.0009
    %v650 = vadd.f32 %v646, 0.0009
    %v651 = vmul.f32 %v639, %v647
    %v652 = vmul.f32 %v640, %v648
    %v653 = vmul.f32 %v641, %v649
    %v654 = vmul.f32 %v642, %v650
    %v655 = vrcp.pop %v651
    %v656 = vrcp.pop %v652
    %v657 = vrcp.pop %v653
    %v658 = vrcp.pop %v654
    %v659 = vmul.f32 %v651, %v655
    %v660 = vmul.f32 %v652, %v656
    %v661 = vmul.f32 %v653, %v657
    %v662 = vmul.f32 %v654, %v658
    %v663 = vsub.f32 2.0, %v659
    %v664 = vsub.f32 2.0, %v660
    %v665 = vsub.f32 2.0, %v661
    %v666 = vsub.f32 2.0, %v662
    %v667 = vmul.f32 %v655, %v663
    %v668 = vmul.f32 %v656, %v664
    %v669 = vmul.f32 %v657, %v665
    %v670 = vmul.f32 %v658, %v666
    %v671 = vmul.f32 %v631, %v667
    %v672 = vmul.f32 %v632, %v668
    %v673 = vmul.f32 %v633, %v669
    %v674 = vmul.f32 %v634, %v670
    %v675 = vsub.f32 1.0, %v671
    %v676 = vsub.f32 1.0, %v672
    %v677 = vsub.f32 1.0, %v673
    %v678 = vsub.f32 1.0, %v674
    %v679 = vmul.f32 %v675, 0.5
    %v680 = vmul.f32 %v676, 0.5
    %v681 = vmul.f32 %v677, 0.5
    %v682 = vmul.f32 %v678, 0.5
    %v683 = vmax.f32 %v679, 0.0
    %v684 = vmax.f32 %v680, 0.0
    %v685 = vmax.f32 %v681, 0.0
    %v686 = vmax.f32 %v682, 0.0
    %v687 = vmin.f32 %v683, 1.0
    %v688 = vmin.f32 %v684, 1.0
    %v689 = vmin.f32 %v685, 1.0
    %v690 = vmin.f32 %v686, 1.0
    %vm691 = vcmask 113664
    %v692 = vsel %vm691, %v687, 0.0
    %vm693 = vcmask 111616
    %v694 = vsel %vm693, %v688, 0.0
    %v695 = vadd.f32 %v692, %v694
    %v696 = vsel %vm691, %v689, 0.0
    %v697 = vadd.f32 %v695, %v696
    %v698 = vsel %vm693, %v690, 0.0
    %v699 = vadd.f32 %v697, %v698
    %700 = vadd.xlane.f32.xlu0 %v699
    %v701 = vpop.xlane.xlu0 %700
    %v702 = vrot.slane %v701, 4
    %v703 = vadd.f32 %v701, %v702
    %v704 = vrot.slane %v703, 2
    %v705 = vadd.f32 %v703, %v704
    %v706 = vrot.slane %v705, 1
    %v707 = vadd.f32 %v705, %v706
    %s708 = vtos %v707
    %s709 = smul.f32 %s105, 0.001953125
    %s710 = smul.f32 %s160, 0.0020833334
    %s711 = sadd.f32 %s709, %s710
    %s712 = smul.f32 %s213, 0.0020833334
    %s713 = sadd.f32 %s711, %s712
    %s714 = smul.f32 %s708, 0.5
    %s715 = smul.f32 %s714, 0.0025510204
    %s716 = sadd.f32 %s713, %s715
    %s717 = sadd.f32 %s716, 0.0
    %v718 = vld [vmem:[#allocation7] sm:$0xff]
    %v719 = vld [vmem:[#allocation7 + $0x8] sm:$0xff]
    %v720 = vld [vmem:[#allocation8] sm:$0xff]
    %v721 = vld [vmem:[#allocation8 + $0x8] sm:$0xff]
    %v722 = vsub.f32 %v718, %v720
    %v723 = vsub.f32 %v719, %v721
    %v724 = vand.u32 2147483647, %v722
    %v725 = vand.u32 2147483647, %v723
    %vm726 = vcmask 64512
    %v727 = vsel %vm726, %v724, 0.0
    %v728 = vsel %vm726, %v725, 0.0
    %v729 = vadd.f32 %v727, %v728
    %730 = vadd.xlane.f32.xlu0 %v729
    %v731 = vpop.xlane.xlu0 %730
    %v732 = vrot.slane %v731, 4
    %v733 = vadd.f32 %v731, %v732
    %v734 = vrot.slane %v733, 2
    %v735 = vadd.f32 %v733, %v734
    %v736 = vrot.slane %v735, 1
    %v737 = vadd.f32 %v735, %v736
    %s738 = vtos %v737
    %v741 = vrot.slane %v722, 7
    %v742 = vrot.slane %v723, 7
    %v745 = vsub.f32 %v722, %v741
    %v746 = vsub.f32 %v723, %v742
    %v747 = vand.u32 2147483647, %v745
    %v748 = vand.u32 2147483647, %v746
    %v751 = vrot.slane %v747, 1
    %v752 = vrot.slane %v748, 1
    %vm755 = vcmask 63488
    %v756 = vsel %vm755, %v751, 0.0
    %v757 = vsel %vm755, %v752, 0.0
    %v758 = vadd.f32 %v756, %v757
    %759 = vadd.xlane.f32.xlu0 %v758
    %v760 = vpop.xlane.xlu0 %759
    %v761 = vrot.slane %v760, 4
    %v762 = vadd.f32 %v760, %v761
    %v763 = vrot.slane %v762, 2
    %v764 = vadd.f32 %v762, %v763
    %v765 = vrot.slane %v764, 1
    %v766 = vadd.f32 %v764, %v765
    %s767 = vtos %v766
    %768 = vrot.lane.b32.xlu0 %v722, 1
    %v769 = vpop.permute.xlu0 %768
    %770 = vrot.lane.b32.xlu0 %v723, 1
    %v771 = vpop.permute.xlu0 %770
    %v774 = vsub.f32 %v722, %v769
    %v775 = vsub.f32 %v723, %v771
    %v776 = vand.u32 2147483647, %v774
    %v777 = vand.u32 2147483647, %v775
    %780 = vrot.lane.b32.xlu0 %v776, 127
    %v781 = vpop.permute.xlu0 %780
    %782 = vrot.lane.b32.xlu0 %v777, 127
    %v783 = vpop.permute.xlu0 %782
    %vm786 = vcmask 56320
    %v787 = vsel %vm786, %v781, 0.0
    %v788 = vsel %vm786, %v783, 0.0
    %v789 = vadd.f32 %v787, %v788
    %790 = vadd.xlane.f32.xlu0 %v789
    %v791 = vpop.xlane.xlu0 %790
    %v792 = vrot.slane %v791, 4
    %v793 = vadd.f32 %v791, %v792
    %v794 = vrot.slane %v793, 2
    %v795 = vadd.f32 %v793, %v794
    %v796 = vrot.slane %v795, 1
    %v797 = vadd.f32 %v795, %v796
    %s798 = vtos %v797
    %v801 = vrot.slane %v718, 1
    %v802 = vrot.slane %v719, 1
    %v805 = vadd.f32 %v718, %v801
    %v806 = vadd.f32 %v719, %v802
    %v807 = vrot.slane %v718, 2
    %v808 = vrot.slane %v719, 2
    %v811 = vadd.f32 %v805, %v807
    %v812 = vadd.f32 %v806, %v808
    %815 = vrot.lane.b32.xlu0 %v811, 127
    %v816 = vpop.permute.xlu0 %815
    %817 = vrot.lane.b32.xlu0 %v812, 127
    %v818 = vpop.permute.xlu0 %817
    %v821 = vadd.f32 %v811, %v816
    %v822 = vadd.f32 %v812, %v818
    %823 = vrot.lane.b32.xlu0 %v811, 126
    %v824 = vpop.permute.xlu0 %823
    %825 = vrot.lane.b32.xlu0 %v812, 126
    %v826 = vpop.permute.xlu0 %825
    %v829 = vadd.f32 %v821, %v824
    %v830 = vadd.f32 %v822, %v826
    %v831 = vmul.f32 %v829, 0.11111111
    %v832 = vmul.f32 %v830, 0.11111111
    %v835 = vrot.slane %v720, 1
    %v836 = vrot.slane %v721, 1
    %v839 = vadd.f32 %v720, %v835
    %v840 = vadd.f32 %v721, %v836
    %v841 = vrot.slane %v720, 2
    %v842 = vrot.slane %v721, 2
    %v845 = vadd.f32 %v839, %v841
    %v846 = vadd.f32 %v840, %v842
    %849 = vrot.lane.b32.xlu0 %v845, 127
    %v850 = vpop.permute.xlu0 %849
    %851 = vrot.lane.b32.xlu0 %v846, 127
    %v852 = vpop.permute.xlu0 %851
    %v855 = vadd.f32 %v845, %v850
    %v856 = vadd.f32 %v846, %v852
    %857 = vrot.lane.b32.xlu0 %v845, 126
    %v858 = vpop.permute.xlu0 %857
    %859 = vrot.lane.b32.xlu0 %v846, 126
    %v860 = vpop.permute.xlu0 %859
    %v863 = vadd.f32 %v855, %v858
    %v864 = vadd.f32 %v856, %v860
    %v865 = vmul.f32 %v863, 0.11111111
    %v866 = vmul.f32 %v864, 0.11111111
    %v867 = vmul.f32 %v718, %v718
    %v868 = vmul.f32 %v719, %v719
    %v871 = vrot.slane %v867, 1
    %v872 = vrot.slane %v868, 1
    %v875 = vadd.f32 %v867, %v871
    %v876 = vadd.f32 %v868, %v872
    %v877 = vrot.slane %v867, 2
    %v878 = vrot.slane %v868, 2
    %v881 = vadd.f32 %v875, %v877
    %v882 = vadd.f32 %v876, %v878
    %885 = vrot.lane.b32.xlu0 %v881, 127
    %v886 = vpop.permute.xlu0 %885
    %887 = vrot.lane.b32.xlu0 %v882, 127
    %v888 = vpop.permute.xlu0 %887
    %v891 = vadd.f32 %v881, %v886
    %v892 = vadd.f32 %v882, %v888
    %893 = vrot.lane.b32.xlu0 %v881, 126
    %v894 = vpop.permute.xlu0 %893
    %895 = vrot.lane.b32.xlu0 %v882, 126
    %v896 = vpop.permute.xlu0 %895
    %v899 = vadd.f32 %v891, %v894
    %v900 = vadd.f32 %v892, %v896
    %v901 = vmul.f32 %v899, 0.11111111
    %v902 = vmul.f32 %v900, 0.11111111
    %v903 = vmul.f32 %v831, %v831
    %v904 = vmul.f32 %v832, %v832
    %v905 = vsub.f32 %v901, %v903
    %v906 = vsub.f32 %v902, %v904
    %v907 = vmul.f32 %v720, %v720
    %v908 = vmul.f32 %v721, %v721
    %v911 = vrot.slane %v907, 1
    %v912 = vrot.slane %v908, 1
    %v915 = vadd.f32 %v907, %v911
    %v916 = vadd.f32 %v908, %v912
    %v917 = vrot.slane %v907, 2
    %v918 = vrot.slane %v908, 2
    %v921 = vadd.f32 %v915, %v917
    %v922 = vadd.f32 %v916, %v918
    %925 = vrot.lane.b32.xlu0 %v921, 127
    %v926 = vpop.permute.xlu0 %925
    %927 = vrot.lane.b32.xlu0 %v922, 127
    %v928 = vpop.permute.xlu0 %927
    %v931 = vadd.f32 %v921, %v926
    %v932 = vadd.f32 %v922, %v928
    %933 = vrot.lane.b32.xlu0 %v921, 126
    %v934 = vpop.permute.xlu0 %933
    %935 = vrot.lane.b32.xlu0 %v922, 126
    %v936 = vpop.permute.xlu0 %935
    %v939 = vadd.f32 %v931, %v934
    %v940 = vadd.f32 %v932, %v936
    %v941 = vmul.f32 %v939, 0.11111111
    %v942 = vmul.f32 %v940, 0.11111111
    %v943 = vmul.f32 %v865, %v865
    %v944 = vmul.f32 %v866, %v866
    %v945 = vsub.f32 %v941, %v943
    %v946 = vsub.f32 %v942, %v944
    %v947 = vmul.f32 %v718, %v720
    %v948 = vmul.f32 %v719, %v721
    %v951 = vrot.slane %v947, 1
    %v952 = vrot.slane %v948, 1
    %v955 = vadd.f32 %v947, %v951
    %v956 = vadd.f32 %v948, %v952
    %v957 = vrot.slane %v947, 2
    %v958 = vrot.slane %v948, 2
    %v961 = vadd.f32 %v955, %v957
    %v962 = vadd.f32 %v956, %v958
    %965 = vrot.lane.b32.xlu0 %v961, 127
    %v966 = vpop.permute.xlu0 %965
    %967 = vrot.lane.b32.xlu0 %v962, 127
    %v968 = vpop.permute.xlu0 %967
    %v971 = vadd.f32 %v961, %v966
    %v972 = vadd.f32 %v962, %v968
    %973 = vrot.lane.b32.xlu0 %v961, 126
    %v974 = vpop.permute.xlu0 %973
    %975 = vrot.lane.b32.xlu0 %v962, 126
    %v976 = vpop.permute.xlu0 %975
    %v979 = vadd.f32 %v971, %v974
    %v980 = vadd.f32 %v972, %v976
    %v981 = vmul.f32 %v979, 0.11111111
    %v982 = vmul.f32 %v980, 0.11111111
    %v983 = vmul.f32 %v831, %v865
    %v984 = vmul.f32 %v832, %v866
    %v985 = vsub.f32 %v981, %v983
    %v986 = vsub.f32 %v982, %v984
    %v987 = vmul.f32 %v831, 2.0
    %v988 = vmul.f32 %v832, 2.0
    %v989 = vmul.f32 %v987, %v865
    %v990 = vmul.f32 %v988, %v866
    %v991 = vadd.f32 %v989, 0.0001
    %v992 = vadd.f32 %v990, 0.0001
    %v993 = vmul.f32 %v985, 2.0
    %v994 = vmul.f32 %v986, 2.0
    %v995 = vadd.f32 %v993, 0.0009
    %v996 = vadd.f32 %v994, 0.0009
    %v997 = vmul.f32 %v991, %v995
    %v998 = vmul.f32 %v992, %v996
    %v999 = vadd.f32 %v903, %v943
    %v1000 = vadd.f32 %v904, %v944
    %v1001 = vadd.f32 %v999, 0.0001
    %v1002 = vadd.f32 %v1000, 0.0001
    %v1003 = vadd.f32 %v905, %v945
    %v1004 = vadd.f32 %v906, %v946
    %v1005 = vadd.f32 %v1003, 0.0009
    %v1006 = vadd.f32 %v1004, 0.0009
    %v1007 = vmul.f32 %v1001, %v1005
    %v1008 = vmul.f32 %v1002, %v1006
    %v1009 = vrcp.pop %v1007
    %v1010 = vrcp.pop %v1008
    %v1011 = vmul.f32 %v1007, %v1009
    %v1012 = vmul.f32 %v1008, %v1010
    %v1013 = vsub.f32 2.0, %v1011
    %v1014 = vsub.f32 2.0, %v1012
    %v1015 = vmul.f32 %v1009, %v1013
    %v1016 = vmul.f32 %v1010, %v1014
    %v1017 = vmul.f32 %v997, %v1015
    %v1018 = vmul.f32 %v998, %v1016
    %v1019 = vsub.f32 1.0, %v1017
    %v1020 = vsub.f32 1.0, %v1018
    %v1021 = vmul.f32 %v1019, 0.5
    %v1022 = vmul.f32 %v1020, 0.5
    %v1023 = vmax.f32 %v1021, 0.0
    %v1024 = vmax.f32 %v1022, 0.0
    %v1025 = vmin.f32 %v1023, 1.0
    %v1026 = vmin.f32 %v1024, 1.0
    %vm1027 = vcmask 46080
    %v1028 = vsel %vm1027, %v1025, 0.0
    %v1029 = vsel %vm1027, %v1026, 0.0
    %v1030 = vadd.f32 %v1028, %v1029
    %1031 = vadd.xlane.f32.xlu0 %v1030
    %v1032 = vpop.xlane.xlu0 %1031
    %v1033 = vrot.slane %v1032, 4
    %v1034 = vadd.f32 %v1032, %v1033
    %v1035 = vrot.slane %v1034, 2
    %v1036 = vadd.f32 %v1034, %v1035
    %v1037 = vrot.slane %v1036, 1
    %v1038 = vadd.f32 %v1036, %v1037
    %s1039 = vtos %v1038
    %s1040 = smul.f32 %s738, 0.0078125
    %s1041 = smul.f32 %s767, 0.008928572
    %s1042 = sadd.f32 %s1040, %s1041
    %s1043 = smul.f32 %s798, 0.008928572
    %s1044 = sadd.f32 %s1042, %s1043
    %s1045 = smul.f32 %s1039, 0.5
    %s1046 = smul.f32 %s1045, 0.013888889
    %s1047 = sadd.f32 %s1044, %s1046
    %s1048 = sadd.f32 %s717, %s1047
    %v1049 = vstv %s1048
    %1050 = vst [vmem:[#allocation10] sm:$0xff] %v1049
    // Predicated region
    $region34: #{tpu_custom_call.1} parent=1 // pred_check
      _
    $region35: #{tpu_custom_call.1} parent=1 // pred_check_branch
      %1052 = sbr.rel (0) target = $region37
    $region36: #{tpu_custom_call.1} parent=1 // pred_region
      %s1054 = ssub.s32 128, 128
      %1055 = vsyncadd [#allocation4], %s1054
      %s1057 = sshll.u32 [#allocation10], 4
      %s1058 = int_to_ptr.vmem [resolvable:$true] %s1057
      %1060 = dma.vmem_to_hbm [thread:$0]  %s1058, 128, %s4, [#allocation4]
    $region37: #{tpu_custom_call.1} parent=1 // pred_fallthru
      _
    // Predicated region
    $region38: #{tpu_custom_call.1} parent=1 // pred_check
      _
    $region39: #{tpu_custom_call.1} parent=1 // pred_check_branch
      %1062 = sbr.rel (0) target = $region41
    $region40: #{tpu_custom_call.1} parent=1 // pred_region
      %1063 = dma.done [#allocation4], 128
    $region41: #{tpu_custom_call.1} parent=1 // pred_fallthru
      _
    %1064 = vsyncpa [#allocation3], 1
    %1065 = vsyncpa [#allocation6], 1
    %1066 = vsyncpa [#allocation9], 1
    %1067 = vsyncpa [#allocation4], 1

</llo_original>
